<compile_context>
chip_gen: v5e
topology: v5e:2x2
jax: 0.10.0
libtpu: 0.0.40
codegen_flags: <defaults>
</compile_context>

<pallas_src>
import jax
import jax.numpy as jnp
import numpy as np
from jax.experimental import pallas as pl
from jax.experimental.pallas import tpu as pltpu

# ----------------------------- problem sizes --------------------------------
N_SRC = 16    # number of "api" (source) nodes
N_DST = 8     # number of "file" (destination) nodes
N_INP = 32    # input feature dim
N_OUT = 16    # per-head GAT output dim
HEADS = 3
NEG_SLOPE = 0.2

# packed-constant row layout (lane width 128, f32)
_ROW_WSRC = 0                      # rows [0, 32)   : [w_src_fused | w_el | 0]
_ROW_WDST = 32                     # rows [32, 64)  : [w_dst_fused | w_er | 0]
_ROW_WHEAD = 64                    # rows [64, 112) : [w_head | 0]
_ROW_BSRC = 112                    # row 112        : [b_src_fused | b_el | 0]
_ROW_BDST = 113                    # row 113        : [b_dst_fused | b_er | 0]
_ROW_BHEAD = 114                   # row 114        : [b_head_fused | 0]
_PACK_ROWS = 120                   # padded to a multiple of 8 sublanes
_LANES = 128


# ------------------------------ Pallas kernel -------------------------------
def str_encoder_kernel(api_ref, file_ref, adj_ref, const_ref, out_ref):
    f32 = jnp.float32
    H, F, Nd, Ns = HEADS, N_OUT, N_DST, N_SRC
    HF = H * F                                                  # 48

    # ---- one fused matmul per side: projected features AND attention logits.
    # (proj ∘ fc) and (proj ∘ fc ∘ attn-selector) weights were composed on the
    # host and concatenated along the output (lane) axis.
    src_all = (jnp.dot(api_ref[...], const_ref[_ROW_WSRC:_ROW_WSRC + N_INP, :],
                       preferred_element_type=f32)
               + const_ref[_ROW_BSRC:_ROW_BSRC + 1, :])         # (Ns, 128)
    dst_all = (jnp.dot(file_ref[...], const_ref[_ROW_WDST:_ROW_WDST + N_INP, :],
                       preferred_element_type=f32)
               + const_ref[_ROW_BDST:_ROW_BDST + 1, :])         # (Nd, 128)

    feat_src = src_all[:, :HF]                                  # (Ns, H*F)
    el_t = jnp.transpose(src_all[:, HF:HF + H])                 # (H, Ns)
    er = dst_all[:, HF:HF + H]                                  # (Nd, H)

    # ---- edge mask, computed once for all heads (sublane-stacked) ----
    adj = adj_ref[...]                                          # (Nd, Ns)
    edge_mask = adj > 0
    maskf = jnp.tile(edge_mask.astype(f32), (H, 1))             # (H*Nd, Ns)
    # additive -1e30 fill is safe while logits stay far below 1e30 (O(1) here)
    neg_fill = jnp.tile(jnp.where(edge_mask, f32(0.0), f32(-1e30)), (H, 1))

    # ---- batched 3-head edge softmax over the source (lane) axis ----
    # e[h*Nd + d, s] = leaky_relu(el[s, h] + er[d, h]); heads stacked along
    # sublanes at 8-aligned offsets 0/8/16 (no lane relayout).
    e = jnp.concatenate(
        [er[:, h:h + 1] + el_t[h:h + 1, :] for h in range(H)], axis=0)
    e = jnp.where(e > 0, e, NEG_SLOPE * e)
    e = e + neg_fill
    e_max = jnp.max(e, axis=1, keepdims=True)                   # (H*Nd, 1)
    ex = jnp.exp(e - e_max) * maskf
    denom = jnp.sum(ex, axis=1, keepdims=True)
    safe_denom = jnp.where(denom > 0, denom, f32(1.0))
    # EUP approx reciprocal + one Newton step (keeps 1e-4 accuracy).
    inv = pl.reciprocal(safe_denom, approx=True)
    inv = inv * (f32(2.0) - safe_denom * inv)
    alpha = ex * inv                                            # (H*Nd, Ns)

    # ---- per-head message passing + head_linear slice, accumulated in f32 ----
    # acc starts from the fused bias (gat_bias folded through head_linear).
    acc = jnp.broadcast_to(const_ref[_ROW_BHEAD:_ROW_BHEAD + 1, :F],
                           (Nd, F)).astype(f32)
    for h in range(H):
        lo = h * F
        rst_h = jnp.dot(alpha[h * Nd:(h + 1) * Nd, :], feat_src[:, lo:lo + F],
                        preferred_element_type=f32)             # (Nd, F)
        acc = acc + jnp.dot(rst_h,
                            const_ref[_ROW_WHEAD + lo:_ROW_WHEAD + lo + F, :F],
                            preferred_element_type=f32)         # (Nd, F)

    out_ref[...] = acc


# ------------------------- host-side parameter fusion ------------------------
def build_packed_params(p):
    """Compose proj∘fc weights, fold attention selectors & biases, and pack
    every constant into a single lane-padded (120, 128) f32 buffer."""
    HF = HEADS * N_OUT

    # proj ∘ fc composition
    w_src_f = p["w_api"] @ p["w_src"]                      # (n_inp, H*F)
    b_src_f = p["b_api"] @ p["w_src"]                      # (1, H*F)
    w_dst_f = p["w_file"] @ p["w_dst"]                     # (n_inp, H*F)
    b_dst_f = p["b_file"] @ p["w_dst"]                     # (1, H*F)

    # fold the per-head attention vectors into the input weights:
    # el = emb_api @ w_el + b_el, er = emb_file @ w_er + b_er
    w_el = jnp.einsum("ihf,hf->ih",
                      w_src_f.reshape(N_INP, HEADS, N_OUT), p["attn_l"])
    b_el = jnp.einsum("ihf,hf->ih",
                      b_src_f.reshape(1, HEADS, N_OUT), p["attn_l"])
    w_er = jnp.einsum("ihf,hf->ih",
                      w_dst_f.reshape(N_INP, HEADS, N_OUT), p["attn_r"])
    b_er = jnp.einsum("ihf,hf->ih",
                      b_dst_f.reshape(1, HEADS, N_OUT), p["attn_r"])

    # fold the GAT per-head bias through head_linear into a single constant
    b_head_f = (p["gat_bias"].reshape(1, HF) @ p["w_head"]
                + p["b_head"])                             # (1, F)

    def pad_lanes(x):
        return jnp.pad(x, ((0, 0), (0, _LANES - x.shape[1])))

    rows = [
        pad_lanes(jnp.concatenate([w_src_f, w_el], axis=1)),   # rows 0..31
        pad_lanes(jnp.concatenate([w_dst_f, w_er], axis=1)),   # rows 32..63
        pad_lanes(p["w_head"]),                                # rows 64..111
        pad_lanes(jnp.concatenate([b_src_f, b_el], axis=1)),   # row 112
        pad_lanes(jnp.concatenate([b_dst_f, b_er], axis=1)),   # row 113
        pad_lanes(b_head_f),                                   # row 114
        jnp.zeros((_PACK_ROWS - 115, _LANES), jnp.float32),    # pad to 120
    ]
    return jnp.concatenate(rows, axis=0).astype(jnp.float32)   # (120, 128)


def str_encoder_forward(emb_api, emb_file, adj, packed_consts):
    vmem = pl.BlockSpec(memory_space=pltpu.MemorySpace.VMEM)
    flops = 2 * (N_SRC * N_INP * _LANES + N_DST * N_INP * _LANES
                 + HEADS * (N_DST * N_SRC * N_OUT + N_DST * N_OUT * N_OUT))
    bytes_accessed = 4 * (emb_api.size + emb_file.size + adj.size
                          + packed_consts.size + N_DST * N_OUT)
    return pl.pallas_call(
        str_encoder_kernel,
        out_shape=jax.ShapeDtypeStruct((N_DST, N_OUT), jnp.float32),
        in_specs=[vmem] * 4,
        out_specs=vmem,
        cost_estimate=pl.CostEstimate(flops=flops,
                                      transcendentals=HEADS * N_DST * N_SRC,
                                      bytes_accessed=bytes_accessed),
    )(emb_api, emb_file, adj, packed_consts)


# ------------------------------ pure-JAX reference ---------------------------
def str_encoder_ref(emb_api, emb_file, adj, p):
    h_src = emb_api @ p["w_api"] + p["b_api"]
    h_dst = emb_file @ p["w_file"] + p["b_file"]
    fs = (h_src @ p["w_src"]).reshape(N_SRC, HEADS, N_OUT)
    fd = (h_dst @ p["w_dst"]).reshape(N_DST, HEADS, N_OUT)
    el = jnp.sum(fs * p["attn_l"][None], axis=-1)          # (Ns, H)
    er = jnp.sum(fd * p["attn_r"][None], axis=-1)          # (Nd, H)
    e = el[None, :, :] + er[:, None, :]                    # (Nd, Ns, H)
    e = jnp.where(e > 0, e, NEG_SLOPE * e)
    mask = adj[:, :, None] > 0
    e = jnp.where(mask, e, -1e30)
    ex = jnp.exp(e - e.max(axis=1, keepdims=True)) * mask
    denom = ex.sum(axis=1, keepdims=True)
    alpha = ex / jnp.where(denom > 0, denom, 1.0)
    rst = jnp.einsum("dsh,shf->dhf", alpha, fs) + p["gat_bias"].reshape(1, HEADS, N_OUT)
    return rst.reshape(N_DST, HEADS * N_OUT) @ p["w_head"] + p["b_head"]


# ------------------------------------ main -----------------------------------
if __name__ == "__main__":
    key = jax.random.PRNGKey(0)
    ks = jax.random.split(key, 16)

    def init(k, shape, scale=0.1):
        return (scale * jax.random.normal(k, shape)).astype(jnp.float32)

    params = {
        "w_api":  init(ks[0], (N_INP, N_INP)),
        "b_api":  init(ks[1], (1, N_INP)),
        "w_file": init(ks[2], (N_INP, N_INP)),
        "b_file": init(ks[3], (1, N_INP)),
        "w_src":  init(ks[4], (N_INP, HEADS * N_OUT)),
        "w_dst":  init(ks[5], (N_INP, HEADS * N_OUT)),
        "attn_l": init(ks[6], (HEADS, N_OUT)),
        "attn_r": init(ks[7], (HEADS, N_OUT)),
        "gat_bias": init(ks[8], (HEADS, N_OUT)),
        "w_head": init(ks[9], (HEADS * N_OUT, N_OUT)),
        "b_head": init(ks[10], (1, N_OUT)),
    }

    emb_api = init(ks[11], (N_SRC, N_INP), scale=1.0)
    emb_file = init(ks[12], (N_DST, N_INP), scale=1.0)

    # dense bipartite adjacency (api -> file); guarantee every dst has >=1 edge
    adj = (jax.random.uniform(ks[13], (N_DST, N_SRC)) < 0.4).astype(jnp.float32)
    adj = adj.at[:, 0].set(1.0)

    packed = build_packed_params(params)

    z = str_encoder_forward(emb_api, emb_file, adj, packed)
    z = jax.block_until_ready(z)

    z_ref = str_encoder_ref(emb_api, emb_file, adj, params)
    np.testing.assert_allclose(np.asarray(z), np.asarray(z_ref),
                               rtol=1e-4, atol=1e-4)
    print("KERNEL_OK")
</pallas_src>

<mosaic_0001>
module attributes {stable_mosaic.version = 11 : i64} {
  func.func @str_encoder_kernel(%arg0: memref<16x32xf32, #tpu.memory_space<vmem>>, %arg1: memref<8x32xf32, #tpu.memory_space<vmem>>, %arg2: memref<8x16xf32, #tpu.memory_space<vmem>>, %arg3: memref<120x128xf32, #tpu.memory_space<vmem>>, %arg4: memref<8x16xf32, #tpu.memory_space<vmem>>) attributes {dimension_semantics = [], scalar_prefetch = 0 : i64, scratch_operands = 0 : i64, tpu.core_type = #tpu.core_type<tc>} {
    %c0 = arith.constant 0 : index
    %c0_0 = arith.constant 0 : index
    %0 = vector.load %arg0[%c0, %c0_0] : memref<16x32xf32, #tpu.memory_space<vmem>>, vector<16x32xf32>
    %c0_1 = arith.constant 0 : index
    %c0_2 = arith.constant 0 : index
    %1 = vector.load %arg3[%c0_1, %c0_2] : memref<120x128xf32, #tpu.memory_space<vmem>>, vector<32x128xf32>
    %cst = arith.constant dense<0.000000e+00> : vector<16x128xf32>
    %2 = tpu.matmul %0, %1, %cst {dimension_numbers = #tpu.dot_dimension_numbers<[1], [0], [0], [1], [0, 0, 1, 1], [], []>} : vector<16x32xf32>, vector<32x128xf32>, vector<16x128xf32> -> vector<16x128xf32>
    %c112 = arith.constant 112 : index
    %c0_3 = arith.constant 0 : index
    %3 = vector.load %arg3[%c112, %c0_3] : memref<120x128xf32, #tpu.memory_space<vmem>>, vector<1x128xf32>
    %4 = vector.broadcast %3 : vector<1x128xf32> to vector<16x128xf32>
    %5 = arith.addf %2, %4 : vector<16x128xf32>
    %c0_4 = arith.constant 0 : index
    %c0_5 = arith.constant 0 : index
    %6 = vector.load %arg1[%c0_4, %c0_5] : memref<8x32xf32, #tpu.memory_space<vmem>>, vector<8x32xf32>
    %c32 = arith.constant 32 : index
    %c0_6 = arith.constant 0 : index
    %7 = vector.load %arg3[%c32, %c0_6] : memref<120x128xf32, #tpu.memory_space<vmem>>, vector<32x128xf32>
    %cst_7 = arith.constant dense<0.000000e+00> : vector<8x128xf32>
    %8 = tpu.matmul %6, %7, %cst_7 {dimension_numbers = #tpu.dot_dimension_numbers<[1], [0], [0], [1], [0, 0, 1, 1], [], []>} : vector<8x32xf32>, vector<32x128xf32>, vector<8x128xf32> -> vector<8x128xf32>
    %c113 = arith.constant 113 : index
    %c0_8 = arith.constant 0 : index
    %9 = vector.load %arg3[%c113, %c0_8] : memref<120x128xf32, #tpu.memory_space<vmem>>, vector<1x128xf32>
    %10 = vector.broadcast %9 : vector<1x128xf32> to vector<8x128xf32>
    %11 = arith.addf %8, %10 : vector<8x128xf32>
    %12 = vector.extract_strided_slice %5 {offsets = [0, 0], sizes = [16, 48], strides = [1, 1]} : vector<16x128xf32> to vector<16x48xf32>
    %13 = vector.extract_strided_slice %5 {offsets = [0, 48], sizes = [16, 3], strides = [1, 1]} : vector<16x128xf32> to vector<16x3xf32>
    %14 = tpu.transpose %13, [1, 0] : vector<16x3xf32> -> vector<3x16xf32>
    %15 = vector.extract_strided_slice %11 {offsets = [0, 48], sizes = [8, 3], strides = [1, 1]} : vector<8x128xf32> to vector<8x3xf32>
    %c0_9 = arith.constant 0 : index
    %c0_10 = arith.constant 0 : index
    %16 = vector.load %arg2[%c0_9, %c0_10] : memref<8x16xf32, #tpu.memory_space<vmem>>, vector<8x16xf32>
    %cst_11 = arith.constant 0.000000e+00 : f32
    %17 = vector.broadcast %cst_11 : f32 to vector<8x16xf32>
    %18 = arith.cmpf ogt, %16, %17 : vector<8x16xf32>
    %19 = arith.extui %18 : vector<8x16xi1> to vector<8x16xi32>
    %20 = arith.sitofp %19 : vector<8x16xi32> to vector<8x16xf32>
    %21 = tpu.concatenate %20, %20, %20 in 0 : vector<8x16xf32>, vector<8x16xf32>, vector<8x16xf32> -> vector<24x16xf32>
    %cst_12 = arith.constant 0.000000e+00 : f32
    %cst_13 = arith.constant -1.000000e+30 : f32
    %22 = vector.broadcast %cst_12 : f32 to vector<8x16xf32>
    %23 = vector.broadcast %cst_13 : f32 to vector<8x16xf32>
    %24 = arith.select %18, %22, %23 : vector<8x16xi1>, vector<8x16xf32>
    %25 = tpu.concatenate %24, %24, %24 in 0 : vector<8x16xf32>, vector<8x16xf32>, vector<8x16xf32> -> vector<24x16xf32>
    %26 = vector.extract_strided_slice %15 {offsets = [0, 0], sizes = [8, 1], strides = [1, 1]} : vector<8x3xf32> to vector<8x1xf32>
    %27 = vector.extract_strided_slice %14 {offsets = [0, 0], sizes = [1, 16], strides = [1, 1]} : vector<3x16xf32> to vector<1x16xf32>
    %28 = vector.broadcast %26 : vector<8x1xf32> to vector<8x16xf32>
    %29 = vector.broadcast %27 : vector<1x16xf32> to vector<8x16xf32>
    %30 = arith.addf %28, %29 : vector<8x16xf32>
    %31 = vector.extract_strided_slice %15 {offsets = [0, 1], sizes = [8, 1], strides = [1, 1]} : vector<8x3xf32> to vector<8x1xf32>
    %32 = vector.extract_strided_slice %14 {offsets = [1, 0], sizes = [1, 16], strides = [1, 1]} : vector<3x16xf32> to vector<1x16xf32>
    %33 = vector.broadcast %31 : vector<8x1xf32> to vector<8x16xf32>
    %34 = vector.broadcast %32 : vector<1x16xf32> to vector<8x16xf32>
    %35 = arith.addf %33, %34 : vector<8x16xf32>
    %36 = vector.extract_strided_slice %15 {offsets = [0, 2], sizes = [8, 1], strides = [1, 1]} : vector<8x3xf32> to vector<8x1xf32>
    %37 = vector.extract_strided_slice %14 {offsets = [2, 0], sizes = [1, 16], strides = [1, 1]} : vector<3x16xf32> to vector<1x16xf32>
    %38 = vector.broadcast %36 : vector<8x1xf32> to vector<8x16xf32>
    %39 = vector.broadcast %37 : vector<1x16xf32> to vector<8x16xf32>
    %40 = arith.addf %38, %39 : vector<8x16xf32>
    %41 = tpu.concatenate %30, %35, %40 in 0 : vector<8x16xf32>, vector<8x16xf32>, vector<8x16xf32> -> vector<24x16xf32>
    %cst_14 = arith.constant 0.000000e+00 : f32
    %42 = vector.broadcast %cst_14 : f32 to vector<24x16xf32>
    %43 = arith.cmpf ogt, %41, %42 : vector<24x16xf32>
    %cst_15 = arith.constant 2.000000e-01 : f32
    %44 = vector.broadcast %cst_15 : f32 to vector<24x16xf32>
    %45 = arith.mulf %44, %41 : vector<24x16xf32>
    %46 = arith.select %43, %41, %45 : vector<24x16xi1>, vector<24x16xf32>
    %47 = arith.addf %46, %25 : vector<24x16xf32>
    %cst_16 = arith.constant dense<0xFF800000> : vector<24xf32>
    %48 = vector.multi_reduction <maximumf>, %47, %cst_16 [1] : vector<24x16xf32> to vector<24xf32>
    %49 = vector.shape_cast %48 : vector<24xf32> to vector<24x1xf32>
    %50 = vector.broadcast %49 : vector<24x1xf32> to vector<24x16xf32>
    %51 = arith.subf %47, %50 : vector<24x16xf32>
    %52 = math.exp %51 : vector<24x16xf32>
    %53 = arith.mulf %52, %21 : vector<24x16xf32>
    %cst_17 = arith.constant dense<0.000000e+00> : vector<24xf32>
    %54 = vector.multi_reduction <add>, %53, %cst_17 [1] : vector<24x16xf32> to vector<24xf32>
    %55 = vector.shape_cast %54 : vector<24xf32> to vector<24x1xf32>
    %cst_18 = arith.constant 0.000000e+00 : f32
    %56 = vector.broadcast %cst_18 : f32 to vector<24x1xf32>
    %57 = arith.cmpf ogt, %55, %56 : vector<24x1xf32>
    %cst_19 = arith.constant 1.000000e+00 : f32
    %58 = vector.broadcast %cst_19 : f32 to vector<24x1xf32>
    %59 = arith.select %57, %55, %58 : vector<24x1xi1>, vector<24x1xf32>
    %60 = tpu.reciprocal %59 {approx = true} : vector<24x1xf32> -> vector<24x1xf32>
    %61 = arith.mulf %59, %60 : vector<24x1xf32>
    %cst_20 = arith.constant 2.000000e+00 : f32
    %62 = vector.broadcast %cst_20 : f32 to vector<24x1xf32>
    %63 = arith.subf %62, %61 : vector<24x1xf32>
    %64 = arith.mulf %60, %63 : vector<24x1xf32>
    %65 = vector.broadcast %64 : vector<24x1xf32> to vector<24x16xf32>
    %66 = arith.mulf %53, %65 : vector<24x16xf32>
    %c114 = arith.constant 114 : index
    %c0_21 = arith.constant 0 : index
    %67 = vector.load %arg3[%c114, %c0_21] : memref<120x128xf32, #tpu.memory_space<vmem>>, vector<1x16xf32>
    %68 = vector.shape_cast %67 : vector<1x16xf32> to vector<1x16xf32>
    %69 = vector.broadcast %68 : vector<1x16xf32> to vector<8x16xf32>
    %70 = vector.extract_strided_slice %66 {offsets = [0, 0], sizes = [8, 16], strides = [1, 1]} : vector<24x16xf32> to vector<8x16xf32>
    %71 = vector.extract_strided_slice %12 {offsets = [0, 0], sizes = [16, 16], strides = [1, 1]} : vector<16x48xf32> to vector<16x16xf32>
    %cst_22 = arith.constant dense<0.000000e+00> : vector<8x16xf32>
    %72 = tpu.matmul %70, %71, %cst_22 {dimension_numbers = #tpu.dot_dimension_numbers<[1], [0], [0], [1], [0, 0, 1, 1], [], []>} : vector<8x16xf32>, vector<16x16xf32>, vector<8x16xf32> -> vector<8x16xf32>
    %c64 = arith.constant 64 : index
    %c0_23 = arith.constant 0 : index
    %73 = vector.load %arg3[%c64, %c0_23] : memref<120x128xf32, #tpu.memory_space<vmem>>, vector<16x16xf32>
    %cst_24 = arith.constant dense<0.000000e+00> : vector<8x16xf32>
    %74 = tpu.matmul %72, %73, %cst_24 {dimension_numbers = #tpu.dot_dimension_numbers<[1], [0], [0], [1], [0, 0, 1, 1], [], []>} : vector<8x16xf32>, vector<16x16xf32>, vector<8x16xf32> -> vector<8x16xf32>
    %75 = arith.addf %69, %74 : vector<8x16xf32>
    %76 = vector.extract_strided_slice %66 {offsets = [8, 0], sizes = [8, 16], strides = [1, 1]} : vector<24x16xf32> to vector<8x16xf32>
    %77 = vector.extract_strided_slice %12 {offsets = [0, 16], sizes = [16, 16], strides = [1, 1]} : vector<16x48xf32> to vector<16x16xf32>
    %cst_25 = arith.constant dense<0.000000e+00> : vector<8x16xf32>
    %78 = tpu.matmul %76, %77, %cst_25 {dimension_numbers = #tpu.dot_dimension_numbers<[1], [0], [0], [1], [0, 0, 1, 1], [], []>} : vector<8x16xf32>, vector<16x16xf32>, vector<8x16xf32> -> vector<8x16xf32>
    %c80 = arith.constant 80 : index
    %c0_26 = arith.constant 0 : index
    %79 = vector.load %arg3[%c80, %c0_26] : memref<120x128xf32, #tpu.memory_space<vmem>>, vector<16x16xf32>
    %cst_27 = arith.constant dense<0.000000e+00> : vector<8x16xf32>
    %80 = tpu.matmul %78, %79, %cst_27 {dimension_numbers = #tpu.dot_dimension_numbers<[1], [0], [0], [1], [0, 0, 1, 1], [], []>} : vector<8x16xf32>, vector<16x16xf32>, vector<8x16xf32> -> vector<8x16xf32>
    %81 = arith.addf %75, %80 : vector<8x16xf32>
    %82 = vector.extract_strided_slice %66 {offsets = [16, 0], sizes = [8, 16], strides = [1, 1]} : vector<24x16xf32> to vector<8x16xf32>
    %83 = vector.extract_strided_slice %12 {offsets = [0, 32], sizes = [16, 16], strides = [1, 1]} : vector<16x48xf32> to vector<16x16xf32>
    %cst_28 = arith.constant dense<0.000000e+00> : vector<8x16xf32>
    %84 = tpu.matmul %82, %83, %cst_28 {dimension_numbers = #tpu.dot_dimension_numbers<[1], [0], [0], [1], [0, 0, 1, 1], [], []>} : vector<8x16xf32>, vector<16x16xf32>, vector<8x16xf32> -> vector<8x16xf32>
    %c96 = arith.constant 96 : index
    %c0_29 = arith.constant 0 : index
    %85 = vector.load %arg3[%c96, %c0_29] : memref<120x128xf32, #tpu.memory_space<vmem>>, vector<16x16xf32>
    %cst_30 = arith.constant dense<0.000000e+00> : vector<8x16xf32>
    %86 = tpu.matmul %84, %85, %cst_30 {dimension_numbers = #tpu.dot_dimension_numbers<[1], [0], [0], [1], [0, 0, 1, 1], [], []>} : vector<8x16xf32>, vector<16x16xf32>, vector<8x16xf32> -> vector<8x16xf32>
    %87 = arith.addf %81, %86 : vector<8x16xf32>
    %c0_31 = arith.constant 0 : index
    %c0_32 = arith.constant 0 : index
    %88 = vector.load %arg4[%c0_31, %c0_32] : memref<8x16xf32, #tpu.memory_space<vmem>>, vector<8x16xf32>
    tpu.vector_store %arg4[%c0_31, %c0_32], %87 {strides = array<i32>} : memref<8x16xf32, #tpu.memory_space<vmem>>, vector<8x16xf32>,
    return
  }
}

</mosaic_0001>

<llo_original>
// kernel: tpu_custom_call.1
$region0: #{tpu_custom_call.1}
  #allocation0 [shape = 'u32[]', space=smem, size = 0x4, offset = 0x4, fixed_abs, tag = 'smem constant byte address 0x4 - core index']
  #allocation1 [shape = 'u32[72,128]{1,0:T(1,128)}', space=vmem, size = 0x9000, scoped, tag = 'internal scratch']
  %s0 = inlined_call_operand.hbm [shape: f32[16,32], index: 0, kind: input, shape index: {}]
  %s1 = inlined_call_operand.hbm [shape: f32[8,32], index: 1, kind: input, shape index: {}]
  %s2 = inlined_call_operand.hbm [shape: f32[8,16], index: 2, kind: input, shape index: {}]
  %s3 = inlined_call_operand.hbm [shape: f32[120,128], index: 3, kind: input, shape index: {}]
  %s4 = inlined_call_operand.hbm [shape: f32[8,16], index: 4, kind: output, shape index: {}]
  %s5 = sld [smem:[#allocation0]]
  $region42: #{tpu_custom_call.1} parent=0
    _
  %s7 = ssub.s32 1, %s5
  %s8 = scalar_select 0, %s7, %s5
  $region1: #{tpu_custom_call.1} parent=0
    #allocation2 [shape = 'u8[8192]{0}', space=vmem, size = 0x2000, scoped, tag = 'input window, operand 0, single buffered']
    #allocation3 [shape = 's32[1]{0}', space=sflag, size = 0x4, scoped, tag = 'scoped memory for tpu_custom_call.1']
    #allocation4 [shape = 's32[1]{0}', space=sflag, size = 0x4, scoped, tag = 'scoped memory for tpu_custom_call.1']
    #allocation5 [shape = 'u8[4096]{0}', space=vmem, size = 0x1000, scoped, tag = 'input window, operand 1, single buffered']
    #allocation6 [shape = 's32[1]{0}', space=sflag, size = 0x4, scoped, tag = 'scoped memory for tpu_custom_call.1']
    #allocation7 [shape = 'u8[4096]{0}', space=vmem, size = 0x1000, scoped, tag = 'input window, operand 2, single buffered']
    #allocation8 [shape = 'u8[61440]{0}', space=vmem, size = 0xf000, scoped, tag = 'input window, operand 3, single buffered']
    #allocation9 [shape = 's32[1]{0}', space=sflag, size = 0x4, scoped, tag = 'scoped memory for tpu_custom_call.1']
    #allocation10 [shape = 'u8[4096]{0}', space=vmem, size = 0x1000, scoped, tag = 'output window, operand 0, single buffered']
    %9 = vsyncpa [#allocation3], 0
    %10 = vsyncpa [#allocation6], 0
    %11 = vsyncpa [#allocation9], 0
    %12 = vsyncpa [#allocation4], 0
    // Predicated region
    $region2: #{tpu_custom_call.1} parent=1 // pred_check
      _
    $region3: #{tpu_custom_call.1} parent=1 // pred_check_branch
      %14 = sbr.rel (0) target = $region5
    $region4: #{tpu_custom_call.1} parent=1 // pred_region
      %16 = vsyncadd [#allocation3], 0
      %s17 = sshll.u32 %s0, 4
      %s18 = int_to_ptr.hbm [resolvable:$true] %s17
      %s19 = sshll.u32 [#allocation2], 4
      %s20 = int_to_ptr.vmem [resolvable:$true] %s19
      %25 = dma.hbm_to_vmem [thread:$0]  %s18, 256, %s20, [#allocation3], 128, 128, 8
    $region5: #{tpu_custom_call.1} parent=1 // pred_fallthru
      _
    // Predicated region
    $region6: #{tpu_custom_call.1} parent=1 // pred_check
      _
    $region7: #{tpu_custom_call.1} parent=1 // pred_check_branch
      %27 = sbr.rel (0) target = $region9
    $region8: #{tpu_custom_call.1} parent=1 // pred_region
      %29 = vsyncadd [#allocation6], 0
      %s31 = sshll.u32 %s1, 4
      %s32 = int_to_ptr.hbm [resolvable:$true] %s31
      %s33 = sshll.u32 [#allocation5], 4
      %s34 = int_to_ptr.vmem [resolvable:$true] %s33
      %36 = dma.hbm_to_vmem [thread:$0]  %s32, 128, %s34, [#allocation6]
    $region9: #{tpu_custom_call.1} parent=1 // pred_fallthru
      _
    // Predicated region
    $region10: #{tpu_custom_call.1} parent=1 // pred_check
      _
    $region11: #{tpu_custom_call.1} parent=1 // pred_check_branch
      %38 = sbr.rel (0) target = $region13
    $region12: #{tpu_custom_call.1} parent=1 // pred_region
      %40 = vsyncadd [#allocation6], 0
      %s42 = sshll.u32 %s2, 4
      %s43 = int_to_ptr.hbm [resolvable:$true] %s42
      %s44 = sshll.u32 [#allocation7], 4
      %s45 = int_to_ptr.vmem [resolvable:$true] %s44
      %47 = dma.hbm_to_vmem [thread:$0]  %s43, 128, %s45, [#allocation6]
    $region13: #{tpu_custom_call.1} parent=1 // pred_fallthru
      _
    // Predicated region
    $region14: #{tpu_custom_call.1} parent=1 // pred_check
      _
    $region15: #{tpu_custom_call.1} parent=1 // pred_check_branch
      %49 = sbr.rel (0) target = $region17
    $region16: #{tpu_custom_call.1} parent=1 // pred_region
      %51 = vsyncadd [#allocation9], 0
      %s52 = sshll.u32 %s3, 4
      %s53 = int_to_ptr.hbm [resolvable:$true] %s52
      %s54 = sshll.u32 [#allocation8], 4
      %s55 = int_to_ptr.vmem [resolvable:$true] %s54
      %60 = dma.hbm_to_vmem [thread:$0]  %s53, 1920, %s55, [#allocation9], 128, 128, 8
    $region17: #{tpu_custom_call.1} parent=1 // pred_fallthru
      _
    // Predicated region
    $region18: #{tpu_custom_call.1} parent=1 // pred_check
      _
    $region19: #{tpu_custom_call.1} parent=1 // pred_check_branch
      %62 = sbr.rel (0) target = $region21
    $region20: #{tpu_custom_call.1} parent=1 // pred_region
      %64 = dma.done [#allocation3], 256
    $region21: #{tpu_custom_call.1} parent=1 // pred_fallthru
      _
    // Predicated region
    $region22: #{tpu_custom_call.1} parent=1 // pred_check
      _
    $region23: #{tpu_custom_call.1} parent=1 // pred_check_branch
      %66 = sbr.rel (0) target = $region25
    $region24: #{tpu_custom_call.1} parent=1 // pred_region
      %68 = dma.done [#allocation6], 128
    $region25: #{tpu_custom_call.1} parent=1 // pred_fallthru
      _
    // Predicated region
    $region26: #{tpu_custom_call.1} parent=1 // pred_check
      _
    $region27: #{tpu_custom_call.1} parent=1 // pred_check_branch
      %70 = sbr.rel (0) target = $region29
    $region28: #{tpu_custom_call.1} parent=1 // pred_region
      %72 = dma.done [#allocation6], 128
    $region29: #{tpu_custom_call.1} parent=1 // pred_fallthru
      _
    // Predicated region
    $region30: #{tpu_custom_call.1} parent=1 // pred_check
      _
    $region31: #{tpu_custom_call.1} parent=1 // pred_check_branch
      %74 = sbr.rel (0) target = $region33
    $region32: #{tpu_custom_call.1} parent=1 // pred_region
      %76 = dma.done [#allocation9], 1920
    $region33: #{tpu_custom_call.1} parent=1 // pred_fallthru
      _
    %v77 = vld [vmem:[#allocation2] sm:$0xff]
    %v78 = vld [vmem:[#allocation2 + $0x8] sm:$0xff]
    %v79 = vld [vmem:[#allocation8] sm:$0xff]
    %v80 = vld [vmem:[#allocation8 + $0x8] sm:$0xff]
    %v81 = vld [vmem:[#allocation8 + $0x10] sm:$0xff]
    %v82 = vld [vmem:[#allocation8 + $0x18] sm:$0xff]
    %v83 = vld [vmem:[#allocation8 + $0x70] sm:$0x1]
    %v84 = vperm.slane %v83, 0
    %vm85 = vcmask 261120
    %v87 = vsel %vm85, %v77, 0
    %v90 = vsel %vm85, %v78, 0
    %92 = vmatpush.msra.mxu0 0.0
    %93 = vmatpush.msra.mxu0 0.0
    %94 = vmatpush.msra.mxu0 0.0
    %95 = vmatpush.msra.mxu0 0.0
    %96 = vmatpush.msra.mxu0 0.0
    %97 = vmatpush.msra.mxu0 0.0
    %98 = vmatpush.msra.mxu0 0.0
    %99 = vmatpush.msra.mxu0 0.0
    %100 = vmatpush.msra.mxu0 0.0
    %101 = vmatpush.msra.mxu0 0.0
    %102 = vmatpush.msra.mxu0 0.0
    %103 = vmatpush.msra.mxu0 0.0
    %104 = vmatpush.msra.mxu0 %v82
    %105 = vmatpush.msra.mxu0 %v81
    %106 = vmatpush.msra.mxu0 %v80
    %107 = vmatpush.msra.mxu0 %v79
    %108 = vmatmul.f32.gmra.mxu0 %v87
    %v109 = vpop.f32.mrf.mxu0
    %v110 = vadd.f32 %v84, %v109
    %111 = vmatmul.f32.gmra.mxu0 %v90
    %v112 = vpop.f32.mrf.mxu0
    %v113 = vadd.f32 %v84, %v112
    %114 = vdwg.mxu0
    %v115 = vld [vmem:[#allocation5] sm:$0xff]
    %v116 = vld [vmem:[#allocation8 + $0x20] sm:$0xff]
    %v117 = vld [vmem:[#allocation8 + $0x28] sm:$0xff]
    %v118 = vld [vmem:[#allocation8 + $0x30] sm:$0xff]
    %v119 = vld [vmem:[#allocation8 + $0x38] sm:$0xff]
    %v120 = vld [vmem:[#allocation8 + $0x71] sm:$0x1]
    %v121 = vperm.slane %v120, 0
    %v123 = vsel %vm85, %v115, 0
    %125 = vmatpush.msra.mxu0 0.0
    %126 = vmatpush.msra.mxu0 0.0
    %127 = vmatpush.msra.mxu0 0.0
    %128 = vmatpush.msra.mxu0 0.0
    %129 = vmatpush.msra.mxu0 0.0
    %130 = vmatpush.msra.mxu0 0.0
    %131 = vmatpush.msra.mxu0 0.0
    %132 = vmatpush.msra.mxu0 0.0
    %133 = vmatpush.msra.mxu0 0.0
    %134 = vmatpush.msra.mxu0 0.0
    %135 = vmatpush.msra.mxu0 0.0
    %136 = vmatpush.msra.mxu0 0.0
    %137 = vmatpush.msra.mxu0 %v119
    %138 = vmatpush.msra.mxu0 %v118
    %139 = vmatpush.msra.mxu0 %v117
    %140 = vmatpush.msra.mxu0 %v116
    %141 = vmatmul.f32.gmra.mxu0 %v123
    %v142 = vpop.f32.mrf.mxu0
    %v143 = vadd.f32 %v121, %v142
    %144 = vdwg.mxu0
    %147 = vrot.lane.b32.xlu0 %v110, 80
    %v148 = vpop.permute.xlu0 %147
    %149 = vrot.lane.b32.xlu0 %v113, 80
    %v150 = vpop.permute.xlu0 %149
    %153 = vxpose.xlu0.b32.start [1/16] %v148, 128
    %154 = vxpose.xlu0.b32.cont [2/16] %v150, 128
    %155 = vxpose.xlu0.b32.cont [3/16] 0.0, 128
    %156 = vxpose.xlu0.b32.cont [4/16] 0.0, 128
    %157 = vxpose.xlu0.b32.cont [5/16] 0.0, 128
    %158 = vxpose.xlu0.b32.cont [6/16] 0.0, 128
    %159 = vxpose.xlu0.b32.cont [7/16] 0.0, 128
    %160 = vxpose.xlu0.b32.cont [8/16] 0.0, 128
    %161 = vxpose.xlu0.b32.cont [9/16] 0.0, 128
    %162 = vxpose.xlu0.b32.cont [10/16] 0.0, 128
    %163 = vxpose.xlu0.b32.cont [11/16] 0.0, 128
    %164 = vxpose.xlu0.b32.cont [12/16] 0.0, 128
    %165 = vxpose.xlu0.b32.cont [13/16] 0.0, 128
    %166 = vxpose.xlu0.b32.cont [14/16] 0.0, 128
    %167 = vxpose.xlu0.b32.cont [15/16] 0.0, 128
    %168 = vxpose.xlu0.b32.end [16/16] 0.0, 128
    %v169 = vpop.trf.xlu0
    %v170 = vpop.trf.xlu0
    %v171 = vpop.trf.xlu0
    %v172 = vpop.trf.xlu0
    %v173 = vpop.trf.xlu0
    %v174 = vpop.trf.xlu0
    %v175 = vpop.trf.xlu0
    %v176 = vpop.trf.xlu0
    %v177 = vpop.trf.xlu0
    %v178 = vpop.trf.xlu0
    %v179 = vpop.trf.xlu0
    %v180 = vpop.trf.xlu0
    %v181 = vpop.trf.xlu0
    %v182 = vpop.trf.xlu0
    %v183 = vpop.trf.xlu0
    %v184 = vpop.trf.xlu0
    %v185 = vld [vmem:[#allocation7] sm:$0xff]
    %vm186 = vcmp.gt.f32.partialorder %v185, 0.0
    %v187 = vsel %vm186, 1, 0
    %v188 = vcvt.s32.f32 %v187
    %v189 = vsel %vm186, 0.0, -1e+30
    %191 = vset.pattern.permute.xlu0 48
    %192 = vperm.xlu0 %191, %v143
    %v193 = vpop.permute.xlu0 %192
    %v195 = vperm.slane %v169, 0
    %v196 = vadd.f32 %v193, %v195
    %197 = vset.pattern.permute.xlu0 49
    %198 = vperm.xlu0 %197, %v143
    %v199 = vpop.permute.xlu0 %198
    %v201 = vperm.slane %v169, 1
    %v202 = vadd.f32 %v199, %v201
    %203 = vset.pattern.permute.xlu0 50
    %204 = vperm.xlu0 %203, %v143
    %v205 = vpop.permute.xlu0 %204
    %v207 = vperm.slane %v169, 2
    %v208 = vadd.f32 %v205, %v207
    %vm209 = vcmp.gt.f32.partialorder %v196, 0.0
    %vm210 = vcmp.gt.f32.partialorder %v202, 0.0
    %vm211 = vcmp.gt.f32.partialorder %v208, 0.0
    %v212 = vmul.f32 %v196, 0.2
    %v213 = vmul.f32 %v202, 0.2
    %v214 = vmul.f32 %v208, 0.2
    %v215 = vsel %vm209, %v196, %v212
    %v216 = vsel %vm210, %v202, %v213
    %v217 = vsel %vm211, %v208, %v214
    %v218 = vadd.f32 %v215, %v189
    %v219 = vadd.f32 %v216, %v189
    %v220 = vadd.f32 %v217, %v189
    %vm221 = vcmask 130048
    %v222 = vsel %vm221, %v218, -inf
    %223 = vmax.xlane.f32.xlu0 %v222
    %v224 = vpop.xlane.xlu0 %223
    %v225 = vsel %vm221, %v219, -inf
    %226 = vmax.xlane.f32.xlu0 %v225
    %v227 = vpop.xlane.xlu0 %226
    %v228 = vsel %vm221, %v220, -inf
    %229 = vmax.xlane.f32.xlu0 %v228
    %v230 = vpop.xlane.xlu0 %229
    %v231 = vsub.f32 %v218, %v224
    %v232 = vsub.f32 %v219, %v227
    %v233 = vsub.f32 %v220, %v230
    %v234 = vmul.f32 %v231, 1.442695
    %v235 = vpow.pop %v234
    %v236 = vmul.f32 %v232, 1.442695
    %v237 = vpow.pop %v236
    %v238 = vmul.f32 %v233, 1.442695
    %v239 = vpow.pop %v238
    %v240 = vmul.f32 %v235, %v188
    %v241 = vmul.f32 %v237, %v188
    %v242 = vmul.f32 %v239, %v188
    %v243 = vsel %vm221, %v240, 0.0
    %244 = vadd.xlane.f32.xlu0 %v243
    %v245 = vpop.xlane.xlu0 %244
    %v246 = vsel %vm221, %v241, 0.0
    %247 = vadd.xlane.f32.xlu0 %v246
    %v248 = vpop.xlane.xlu0 %247
    %v249 = vsel %vm221, %v242, 0.0
    %250 = vadd.xlane.f32.xlu0 %v249
    %v251 = vpop.xlane.xlu0 %250
    %vm252 = vcmp.gt.f32.partialorder %v245, 0.0
    %vm253 = vcmp.gt.f32.partialorder %v248, 0.0
    %vm254 = vcmp.gt.f32.partialorder %v251, 0.0
    %v255 = vsel %vm252, %v245, 1.0
    %v256 = vsel %vm253, %v248, 1.0
    %v257 = vsel %vm254, %v251, 1.0
    %v258 = vrcp.pop %v255
    %v259 = vrcp.pop %v256
    %v260 = vrcp.pop %v257
    %v261 = vmul.f32 %v255, %v258
    %v262 = vmul.f32 %v256, %v259
    %v263 = vmul.f32 %v257, %v260
    %v264 = vsub.f32 2.0, %v261
    %v265 = vsub.f32 2.0, %v262
    %v266 = vsub.f32 2.0, %v263
    %v267 = vmul.f32 %v258, %v264
    %v268 = vmul.f32 %v259, %v265
    %v269 = vmul.f32 %v260, %v266
    %v270 = vmul.f32 %v240, %v267
    %v271 = vmul.f32 %v241, %v268
    %v272 = vmul.f32 %v242, %v269
    %v273 = vld [vmem:[#allocation8 + $0x72] sm:$0x1]
    %v274 = vperm.slane %v273, 0
    %v276 = vsel %vm221, %v270, 0
    %278 = vmatpush.msra.mxu0 0.0
    %279 = vmatpush.msra.mxu0 0.0
    %280 = vmatpush.msra.mxu0 0.0
    %281 = vmatpush.msra.mxu0 0.0
    %282 = vmatpush.msra.mxu0 0.0
    %283 = vmatpush.msra.mxu0 0.0
    %284 = vmatpush.msra.mxu0 0.0
    %285 = vmatpush.msra.mxu0 0.0
    %286 = vmatpush.msra.mxu0 0.0
    %287 = vmatpush.msra.mxu0 0.0
    %288 = vmatpush.msra.mxu0 0.0
    %289 = vmatpush.msra.mxu0 0.0
    %290 = vmatpush.msra.mxu0 0.0
    %291 = vmatpush.msra.mxu0 0.0
    %292 = vmatpush.msra.mxu0 %v113
    %293 = vmatpush.msra.mxu0 %v110
    %294 = vmatmul.f32.gmra.mxu0 %v276
    %v295 = vpop.f32.mrf.mxu0
    %v296 = vadd.f32 0.0, %v295
    %297 = vdwg.mxu0
    %v298 = vld [vmem:[#allocation8 + $0x40] sm:$0xff]
    %v299 = vld [vmem:[#allocation8 + $0x48] sm:$0xff]
    %v301 = vsel %vm221, %v296, 0
    %303 = vmatpush.msra.mxu0 0.0
    %304 = vmatpush.msra.mxu0 0.0
    %305 = vmatpush.msra.mxu0 0.0
    %306 = vmatpush.msra.mxu0 0.0
    %307 = vmatpush.msra.mxu0 0.0
    %308 = vmatpush.msra.mxu0 0.0
    %309 = vmatpush.msra.mxu0 0.0
    %310 = vmatpush.msra.mxu0 0.0
    %311 = vmatpush.msra.mxu0 0.0
    %312 = vmatpush.msra.mxu0 0.0
    %313 = vmatpush.msra.mxu0 0.0
    %314 = vmatpush.msra.mxu0 0.0
    %315 = vmatpush.msra.mxu0 0.0
    %316 = vmatpush.msra.mxu0 0.0
    %317 = vmatpush.msra.mxu0 %v299
    %318 = vmatpush.msra.mxu0 %v298
    %319 = vmatmul.f32.gmra.mxu0 %v301
    %v320 = vpop.f32.mrf.mxu0
    %v321 = vadd.f32 0.0, %v320
    %322 = vdwg.mxu0
    %v323 = vadd.f32 %v274, %v321
    %324 = vrot.lane.b32.xlu0 %v110, 112
    %v325 = vpop.permute.xlu0 %324
    %326 = vrot.lane.b32.xlu0 %v113, 112
    %v327 = vpop.permute.xlu0 %326
    %v331 = vsel %vm221, %v271, 0
    %333 = vmatpush.msra.mxu0 0.0
    %334 = vmatpush.msra.mxu0 0.0
    %335 = vmatpush.msra.mxu0 0.0
    %336 = vmatpush.msra.mxu0 0.0
    %337 = vmatpush.msra.mxu0 0.0
    %338 = vmatpush.msra.mxu0 0.0
    %339 = vmatpush.msra.mxu0 0.0
    %340 = vmatpush.msra.mxu0 0.0
    %341 = vmatpush.msra.mxu0 0.0
    %342 = vmatpush.msra.mxu0 0.0
    %343 = vmatpush.msra.mxu0 0.0
    %344 = vmatpush.msra.mxu0 0.0
    %345 = vmatpush.msra.mxu0 0.0
    %346 = vmatpush.msra.mxu0 0.0
    %347 = vmatpush.msra.mxu0 %v327
    %348 = vmatpush.msra.mxu0 %v325
    %349 = vmatmul.f32.gmra.mxu0 %v331
    %v350 = vpop.f32.mrf.mxu0
    %v351 = vadd.f32 0.0, %v350
    %352 = vdwg.mxu0
    %v353 = vld [vmem:[#allocation8 + $0x50] sm:$0xff]
    %v354 = vld [vmem:[#allocation8 + $0x58] sm:$0xff]
    %v356 = vsel %vm221, %v351, 0
    %358 = vmatpush.msra.mxu0 0.0
    %359 = vmatpush.msra.mxu0 0.0
    %360 = vmatpush.msra.mxu0 0.0
    %361 = vmatpush.msra.mxu0 0.0
    %362 = vmatpush.msra.mxu0 0.0
    %363 = vmatpush.msra.mxu0 0.0
    %364 = vmatpush.msra.mxu0 0.0
    %365 = vmatpush.msra.mxu0 0.0
    %366 = vmatpush.msra.mxu0 0.0
    %367 = vmatpush.msra.mxu0 0.0
    %368 = vmatpush.msra.mxu0 0.0
    %369 = vmatpush.msra.mxu0 0.0
    %370 = vmatpush.msra.mxu0 0.0
    %371 = vmatpush.msra.mxu0 0.0
    %372 = vmatpush.msra.mxu0 %v354
    %373 = vmatpush.msra.mxu0 %v353
    %374 = vmatmul.f32.gmra.mxu0 %v356
    %v375 = vpop.f32.mrf.mxu0
    %v376 = vadd.f32 0.0, %v375
    %377 = vdwg.mxu0
    %v378 = vadd.f32 %v323, %v376
    %379 = vrot.lane.b32.xlu0 %v110, 96
    %v380 = vpop.permute.xlu0 %379
    %381 = vrot.lane.b32.xlu0 %v113, 96
    %v382 = vpop.permute.xlu0 %381
    %v386 = vsel %vm221, %v272, 0
    %388 = vmatpush.msra.mxu0 0.0
    %389 = vmatpush.msra.mxu0 0.0
    %390 = vmatpush.msra.mxu0 0.0
    %391 = vmatpush.msra.mxu0 0.0
    %392 = vmatpush.msra.mxu0 0.0
    %393 = vmatpush.msra.mxu0 0.0
    %394 = vmatpush.msra.mxu0 0.0
    %395 = vmatpush.msra.mxu0 0.0
    %396 = vmatpush.msra.mxu0 0.0
    %397 = vmatpush.msra.mxu0 0.0
    %398 = vmatpush.msra.mxu0 0.0
    %399 = vmatpush.msra.mxu0 0.0
    %400 = vmatpush.msra.mxu0 0.0
    %401 = vmatpush.msra.mxu0 0.0
    %402 = vmatpush.msra.mxu0 %v382
    %403 = vmatpush.msra.mxu0 %v380
    %404 = vmatmul.f32.gmra.mxu0 %v386
    %v405 = vpop.f32.mrf.mxu0
    %v406 = vadd.f32 0.0, %v405
    %407 = vdwg.mxu0
    %v408 = vld [vmem:[#allocation8 + $0x60] sm:$0xff]
    %v409 = vld [vmem:[#allocation8 + $0x68] sm:$0xff]
    %v411 = vsel %vm221, %v406, 0
    %413 = vmatpush.msra.mxu0 0.0
    %414 = vmatpush.msra.mxu0 0.0
    %415 = vmatpush.msra.mxu0 0.0
    %416 = vmatpush.msra.mxu0 0.0
    %417 = vmatpush.msra.mxu0 0.0
    %418 = vmatpush.msra.mxu0 0.0
    %419 = vmatpush.msra.mxu0 0.0
    %420 = vmatpush.msra.mxu0 0.0
    %421 = vmatpush.msra.mxu0 0.0
    %422 = vmatpush.msra.mxu0 0.0
    %423 = vmatpush.msra.mxu0 0.0
    %424 = vmatpush.msra.mxu0 0.0
    %425 = vmatpush.msra.mxu0 0.0
    %426 = vmatpush.msra.mxu0 0.0
    %427 = vmatpush.msra.mxu0 %v409
    %428 = vmatpush.msra.mxu0 %v408
    %429 = vmatmul.f32.gmra.mxu0 %v411
    %v430 = vpop.f32.mrf.mxu0
    %v431 = vadd.f32 0.0, %v430
    %432 = vdwg.mxu0
    %v433 = vadd.f32 %v378, %v431
    %434 = vst.msk [vmem:[#allocation10] sm:$0xff] %vm221, %v433
    // Predicated region
    $region34: #{tpu_custom_call.1} parent=1 // pred_check
      _
    $region35: #{tpu_custom_call.1} parent=1 // pred_check_branch
      %436 = sbr.rel (0) target = $region37
    $region36: #{tpu_custom_call.1} parent=1 // pred_region
      %438 = vsyncadd [#allocation4], 0
      %s440 = sshll.u32 [#allocation10], 4
      %s441 = int_to_ptr.vmem [resolvable:$true] %s440
      %s442 = sshll.u32 %s4, 4
      %s443 = int_to_ptr.hbm [resolvable:$true] %s442
      %445 = dma.vmem_to_hbm [thread:$0]  %s441, 128, %s443, [#allocation4]
    $region37: #{tpu_custom_call.1} parent=1 // pred_fallthru
      _
    // Predicated region
    $region38: #{tpu_custom_call.1} parent=1 // pred_check
      _
    $region39: #{tpu_custom_call.1} parent=1 // pred_check_branch
      %447 = sbr.rel (0) target = $region41
    $region40: #{tpu_custom_call.1} parent=1 // pred_region
      %449 = dma.done [#allocation4], 128
    $region41: #{tpu_custom_call.1} parent=1 // pred_fallthru
      _
    %450 = vsyncpa [#allocation3], 1
    %451 = vsyncpa [#allocation6], 1
    %452 = vsyncpa [#allocation9], 1
    %453 = vsyncpa [#allocation4], 1

</llo_original>
